<compile_context>
chip_gen: v6e
topology: v6e:2x2x1
jax: 0.10.0
libtpu: 0.0.40
codegen_flags: <defaults>
</compile_context>

<pallas_src>
import functools

import jax
import jax.numpy as jnp
from jax.experimental import pallas as pl
from jax.experimental.pallas import tpu as pltpu


# ----------------------------- Pallas kernel --------------------------------
def _attention_gate_kernel(g_ref, x_ref, w_ref, out_ref, *, F_g, F_l, use_mxu):
    # Blocks: g (1, F_g, TP), x (1, F_l, TP), packed params (F_int, F_g+F_l+3),
    # out (1, F_l, TP).  Pixels live on the lane axis.
    g = g_ref[0].astype(jnp.float32)          # (F_g, TP)
    x = x_ref[0].astype(jnp.float32)          # (F_l, TP)
    W = w_ref[...]                            # (F_int, F_g+F_l+3), f32, BN-folded
    C = F_g + F_l
    tp = g.shape[-1]

    wg = W[:, :F_g]                           # (F_int, F_g)
    wx = W[:, F_g:C]                          # (F_int, F_l)
    bsum = W[:, C:C + 1]                      # (F_int, 1)  = b_g + b_x
    wpsi = W[:, C + 1:C + 2]                  # (F_int, 1)
    bpsi = W[0:1, C + 2:C + 3]                # (1, 1)

    if use_mxu:
        # Single skinny matmul on the MXU (vector-extended slot), freeing the
        # VALU for psi / hardsigmoid / gating — the right choice on v7x
        # (VALU-bound) and for medium/large channel counts everywhere.
        gx = jnp.concatenate([g, x], axis=0)                  # (C, TP)
        acc = jnp.dot(W[:, :C], gx,
                      preferred_element_type=jnp.float32) + bsum
    else:
        # Tiny channel counts on HBM-bound chips: unrolled VPU broadcast MACs,
        # first partial product fused with the bias and the rest tree-summed to
        # keep the per-vreg dependency chain short.
        parts = [wg[:, j:j + 1] * g[j:j + 1, :] for j in range(F_g)]
        parts += [wx[:, i:i + 1] * x[i:i + 1, :] for i in range(F_l)]
        parts[0] = parts[0] + bsum
        while len(parts) > 1:
            nxt = [parts[i] + parts[i + 1] for i in range(0, len(parts) - 1, 2)]
            if len(parts) % 2:
                nxt.append(parts[-1])
            parts = nxt
        acc = parts[0]                                         # (F_int, TP)

    p = jnp.maximum(acc, 0.0)                                  # relu

    # psi: (F_int -> 1) projection as multiply + sublane (XLU) reduction,
    # BN folded, then hardsigmoid = clip(z/6 + 0.5, 0, 1).
    z = jnp.sum(p * wpsi, axis=0, keepdims=True) + bpsi        # (1, TP)
    psi = jnp.clip(z * (1.0 / 6.0) + 0.5, 0.0, 1.0)

    # Gate the skip connection; (1, TP) broadcasts over the channel sublanes.
    out_ref[0] = (x * psi).astype(out_ref.dtype)


# ------------------------------- helpers -------------------------------------
def _fold_bn(w, b, gamma, beta, mean, var, eps=1e-5):
    """Fold inference-mode BatchNorm into a 1x1-conv weight/bias.

    w: (C_out, C_in)   b, gamma, beta, mean, var: (C_out,)
    """
    scale = gamma / jnp.sqrt(var + eps)
    return w * scale[:, None], (b - mean) * scale + beta


def _tpu_hw():
    """(physical VMEM bytes, is_v7x). Robust to missing query APIs."""
    vmem = 128 << 20
    is_v7 = False
    try:
        kind = jax.devices()[0].device_kind.lower()
        is_v7 = "v7" in kind
    except Exception:  # pragma: no cover
        pass
    try:
        vmem = int(pltpu.get_tpu_info().vmem_capacity_bytes)
    except Exception:
        vmem = (64 << 20) if is_v7 else (128 << 20)
    if is_v7:
        vmem = min(vmem, 64 << 20)
    return vmem, is_v7


def _pick_pixel_tile(HW, N, F_g, F_l, itemsize, vmem_budget, max_tp=65536):
    """Largest lane-dense pixel tile whose double-buffered g/x/out tiles fit
    the VMEM budget; capped so per-step HBM traffic is multi-MB (amortizing
    the ~0.35us fixed per-step cost) and, for N==1, so the grid keeps >=2
    steps for v7x's two TensorCores."""
    bytes_per_pixel = 2 * (F_g + 2 * F_l) * itemsize   # x2 double buffers
    tp = max(128, (vmem_budget // bytes_per_pixel) // 128 * 128)
    tp = min(tp, max_tp)
    if N == 1 and HW >= 256:
        tp = min(tp, pl.cdiv(pl.cdiv(HW, 2), 128) * 128)
    if tp >= HW:
        return int(HW)       # single full-extent block (no lane padding)
    return int(tp)


# ------------------------------- wrapper -------------------------------------
def attention_gate(g, x, params):
    """g: (N, F_g, H, W), x: (N, F_l, H, W) in NCHW."""
    N, F_g, Hg, Wg = g.shape
    _, F_l, H, W = x.shape
    F_int = params["wg"].shape[0]

    if (Hg, Wg) != (H, W):
        # TODO(synk): fuse the bilinear upsample into the kernel (scalar-prefetch
        # source row indices/weights) to avoid the extra HBM round trip of g.
        g = jax.image.resize(g, (N, F_g, H, W), method="bilinear",
                             antialias=False)

    HW = H * W
    # NCHW -> (N, C, H*W) is a pure reshape (no transpose, no HBM round trip).
    g3 = g.reshape(N, F_g, HW)
    x3 = x.reshape(N, F_l, HW)

    # Fold BN into the 1x1 convs; fold the two branch biases into one; pack
    # everything into a single (F_int, F_g+F_l+3) parameter block:
    #   cols [0:F_g]=W_g, [F_g:F_g+F_l]=W_x, [C]=b_g+b_x, [C+1]=W_psi, [C+2]=b_psi
    wg_e, bg_e = _fold_bn(params["wg"], params["bg"], params["gamma_g"],
                          params["beta_g"], params["mean_g"], params["var_g"])
    wx_e, bx_e = _fold_bn(params["wx"], params["bx"], params["gamma_x"],
                          params["beta_x"], params["mean_x"], params["var_x"])
    wpsi_e, bpsi_e = _fold_bn(params["wpsi"], params["bpsi"], params["gamma_p"],
                              params["beta_p"], params["mean_p"], params["var_p"])
    C = F_g + F_l
    P = C + 3
    packed = jnp.zeros((F_int, P), jnp.float32)
    packed = packed.at[:, :F_g].set(wg_e)
    packed = packed.at[:, F_g:C].set(wx_e)
    packed = packed.at[:, C].set(bg_e + bx_e)
    packed = packed.at[:, C + 1].set(wpsi_e.reshape(F_int))
    packed = packed.at[0, C + 2].set(bpsi_e.reshape(()))

    vmem_phys, is_v7 = _tpu_hw()
    itemsize = jnp.dtype(x.dtype).itemsize
    tp = _pick_pixel_tile(HW, N, F_g, F_l, itemsize,
                          vmem_budget=int(vmem_phys * 0.6))
    n_tiles = pl.cdiv(HW, tp)
    grid = (N, n_tiles)

    # MXU for medium/large channel counts, and on v7x where the VALU slot is
    # the binder; VPU MAC path only for tiny channels on HBM-bound v5e/v6e.
    use_mxu = is_v7 or (C >= 16) or (F_int > 8)

    # VMEM limit: double-buffered g/x/out tiles + padded weight block + margin.
    tile_bytes = (F_g + 2 * F_l) * tp * itemsize
    w_bytes = (pl.cdiv(F_int, 8) * 8) * (pl.cdiv(P, 128) * 128) * 4
    vmem_limit = int(min(int(vmem_phys * 0.9),
                         max(8 << 20, 2 * tile_bytes + 2 * w_bytes + (2 << 20))))

    kernel = functools.partial(_attention_gate_kernel,
                               F_g=F_g, F_l=F_l, use_mxu=use_mxu)

    out3 = pl.pallas_call(
        kernel,
        out_shape=jax.ShapeDtypeStruct((N, F_l, HW), x.dtype),
        grid_spec=pltpu.PrefetchScalarGridSpec(
            num_scalar_prefetch=0,
            grid=grid,
            in_specs=[
                pl.BlockSpec((1, F_g, tp), lambda n, t: (n, 0, t)),   # g pixels
                pl.BlockSpec((1, F_l, tp), lambda n, t: (n, 0, t)),   # x pixels
                pl.BlockSpec((F_int, P), lambda n, t: (0, 0)),        # packed params
            ],
            out_specs=pl.BlockSpec((1, F_l, tp), lambda n, t: (n, 0, t)),
        ),
        compiler_params=pltpu.CompilerParams(
            dimension_semantics=("parallel", "parallel"),
            vmem_limit_bytes=vmem_limit),
    )(g3, x3, packed)

    return out3.reshape(N, F_l, H, W)


# ------------------------------ reference ------------------------------------
def attention_gate_ref(g, x, params):
    N, F_g, Hg, Wg = g.shape
    _, F_l, H, W = x.shape
    if (Hg, Wg) != (H, W):
        g = jax.image.resize(g, (N, F_g, H, W), method="bilinear",
                             antialias=False)
    wg, bg = _fold_bn(params["wg"], params["bg"], params["gamma_g"],
                      params["beta_g"], params["mean_g"], params["var_g"])
    wx, bx = _fold_bn(params["wx"], params["bx"], params["gamma_x"],
                      params["beta_x"], params["mean_x"], params["var_x"])
    wpsi, bpsi = _fold_bn(params["wpsi"], params["bpsi"], params["gamma_p"],
                          params["beta_p"], params["mean_p"], params["var_p"])
    gc = jnp.transpose(g, (0, 2, 3, 1))      # (N,H,W,F_g)
    xc = jnp.transpose(x, (0, 2, 3, 1))      # (N,H,W,F_l)
    g1 = gc @ wg.T + bg
    x1 = xc @ wx.T + bx
    p = jax.nn.relu(g1 + x1)
    z = p @ wpsi.T + bpsi
    psi = jnp.clip(z / 6.0 + 0.5, 0.0, 1.0)
    return jnp.transpose(xc * psi, (0, 3, 1, 2))


# -------------------------------- main ----------------------------------------
def _make_params(key, F_g, F_l, F_int):
    ks = jax.random.split(key, 8)
    return {
        # conv weights in PyTorch layout (C_out, C_in)  (1x1 kernel squeezed)
        "wg": jax.random.normal(ks[0], (F_int, F_g), jnp.float32) * 0.2,
        "bg": jax.random.normal(ks[1], (F_int,), jnp.float32) * 0.1,
        "wx": jax.random.normal(ks[2], (F_int, F_l), jnp.float32) * 0.2,
        "bx": jax.random.normal(ks[3], (F_int,), jnp.float32) * 0.1,
        "wpsi": jax.random.normal(ks[4], (1, F_int), jnp.float32) * 0.2,
        "bpsi": jax.random.normal(ks[5], (1,), jnp.float32) * 0.1,
        # BatchNorm (inference mode running stats + affine)
        "gamma_g": jnp.ones((F_int,), jnp.float32) * 1.1,
        "beta_g": jnp.full((F_int,), 0.05, jnp.float32),
        "mean_g": jax.random.normal(ks[6], (F_int,), jnp.float32) * 0.1,
        "var_g": jnp.ones((F_int,), jnp.float32) * 0.9,
        "gamma_x": jnp.ones((F_int,), jnp.float32) * 0.95,
        "beta_x": jnp.full((F_int,), -0.02, jnp.float32),
        "mean_x": jax.random.normal(ks[7], (F_int,), jnp.float32) * 0.1,
        "var_x": jnp.ones((F_int,), jnp.float32) * 1.2,
        "gamma_p": jnp.ones((1,), jnp.float32),
        "beta_p": jnp.zeros((1,), jnp.float32),
        "mean_p": jnp.zeros((1,), jnp.float32),
        "var_p": jnp.ones((1,), jnp.float32),
    }


if __name__ == "__main__":
    key = jax.random.PRNGKey(0)
    kg, kx, kp = jax.random.split(key, 3)

    N, F_g, F_l, F_int, H, W = 2, 4, 4, 8, 16, 16
    g = jax.random.normal(kg, (N, F_g, H, W), jnp.float32)
    x = jax.random.normal(kx, (N, F_l, H, W), jnp.float32)
    params = _make_params(kp, F_g, F_l, F_int)

    out = attention_gate(g, x, params)
    out = jax.block_until_ready(out)

    ref = attention_gate_ref(g, x, params)
    assert out.shape == x.shape
    assert jnp.allclose(out, ref, atol=1e-4, rtol=1e-4)
    print("KERNEL_OK")
</pallas_src>

<mosaic_0001>
module attributes {stable_mosaic.version = 11 : i64} {
  func.func @_attention_gate_kernel(%arg0: i32, %arg1: i32, %arg2: memref<1x4x256xf32, #tpu.memory_space<vmem>>, %arg3: memref<1x4x256xf32, #tpu.memory_space<vmem>>, %arg4: memref<8x11xf32, #tpu.memory_space<vmem>>, %arg5: memref<1x4x256xf32, #tpu.memory_space<vmem>>) attributes {dimension_semantics = [#tpu.dimension_semantics<parallel>, #tpu.dimension_semantics<parallel>], iteration_bounds = array<i64: 2, 1>, scalar_prefetch = 0 : i64, scratch_operands = 0 : i64, tpu.core_type = #tpu.core_type<tc>, window_params = [{transform_indices = @transform_0, window_bounds = array<i64: 1, 4, 256>}, {transform_indices = @transform_1, window_bounds = array<i64: 1, 4, 256>}, {pipeline_mode = #tpu.pipeline_mode<synchronous>, transform_indices = @transform_2, window_bounds = array<i64: 8, 11>}, {transform_indices = @transform_3, window_bounds = array<i64: 1, 4, 256>}]} {
    %c0 = arith.constant 0 : index
    %c0_0 = arith.constant 0 : index
    %c0_1 = arith.constant 0 : index
    %0 = vector.load %arg2[%c0, %c0_0, %c0_1] : memref<1x4x256xf32, #tpu.memory_space<vmem>>, vector<1x4x256xf32>
    %1 = vector.shape_cast %0 : vector<1x4x256xf32> to vector<4x256xf32>
    %c0_2 = arith.constant 0 : index
    %c0_3 = arith.constant 0 : index
    %c0_4 = arith.constant 0 : index
    %2 = vector.load %arg3[%c0_2, %c0_3, %c0_4] : memref<1x4x256xf32, #tpu.memory_space<vmem>>, vector<1x4x256xf32>
    %3 = vector.shape_cast %2 : vector<1x4x256xf32> to vector<4x256xf32>
    %c0_5 = arith.constant 0 : index
    %c0_6 = arith.constant 0 : index
    %4 = vector.load %arg4[%c0_5, %c0_6] : memref<8x11xf32, #tpu.memory_space<vmem>>, vector<8x11xf32>
    %5 = vector.extract_strided_slice %4 {offsets = [0, 0], sizes = [8, 4], strides = [1, 1]} : vector<8x11xf32> to vector<8x4xf32>
    %6 = vector.extract_strided_slice %4 {offsets = [0, 4], sizes = [8, 4], strides = [1, 1]} : vector<8x11xf32> to vector<8x4xf32>
    %7 = vector.extract_strided_slice %4 {offsets = [0, 8], sizes = [8, 1], strides = [1, 1]} : vector<8x11xf32> to vector<8x1xf32>
    %8 = vector.extract_strided_slice %4 {offsets = [0, 9], sizes = [8, 1], strides = [1, 1]} : vector<8x11xf32> to vector<8x1xf32>
    %9 = vector.extract_strided_slice %4 {offsets = [0, 10], sizes = [1, 1], strides = [1, 1]} : vector<8x11xf32> to vector<1x1xf32>
    %10 = vector.extract_strided_slice %5 {offsets = [0, 0], sizes = [8, 1], strides = [1, 1]} : vector<8x4xf32> to vector<8x1xf32>
    %11 = vector.extract_strided_slice %1 {offsets = [0, 0], sizes = [1, 256], strides = [1, 1]} : vector<4x256xf32> to vector<1x256xf32>
    %12 = vector.broadcast %10 : vector<8x1xf32> to vector<8x256xf32>
    %13 = vector.broadcast %11 : vector<1x256xf32> to vector<8x256xf32>
    %14 = arith.mulf %12, %13 : vector<8x256xf32>
    %15 = vector.extract_strided_slice %5 {offsets = [0, 1], sizes = [8, 1], strides = [1, 1]} : vector<8x4xf32> to vector<8x1xf32>
    %16 = vector.extract_strided_slice %1 {offsets = [1, 0], sizes = [1, 256], strides = [1, 1]} : vector<4x256xf32> to vector<1x256xf32>
    %17 = vector.broadcast %15 : vector<8x1xf32> to vector<8x256xf32>
    %18 = vector.broadcast %16 : vector<1x256xf32> to vector<8x256xf32>
    %19 = arith.mulf %17, %18 : vector<8x256xf32>
    %20 = vector.extract_strided_slice %5 {offsets = [0, 2], sizes = [8, 1], strides = [1, 1]} : vector<8x4xf32> to vector<8x1xf32>
    %21 = vector.extract_strided_slice %1 {offsets = [2, 0], sizes = [1, 256], strides = [1, 1]} : vector<4x256xf32> to vector<1x256xf32>
    %22 = vector.broadcast %20 : vector<8x1xf32> to vector<8x256xf32>
    %23 = vector.broadcast %21 : vector<1x256xf32> to vector<8x256xf32>
    %24 = arith.mulf %22, %23 : vector<8x256xf32>
    %25 = vector.extract_strided_slice %5 {offsets = [0, 3], sizes = [8, 1], strides = [1, 1]} : vector<8x4xf32> to vector<8x1xf32>
    %26 = vector.extract_strided_slice %1 {offsets = [3, 0], sizes = [1, 256], strides = [1, 1]} : vector<4x256xf32> to vector<1x256xf32>
    %27 = vector.broadcast %25 : vector<8x1xf32> to vector<8x256xf32>
    %28 = vector.broadcast %26 : vector<1x256xf32> to vector<8x256xf32>
    %29 = arith.mulf %27, %28 : vector<8x256xf32>
    %30 = vector.extract_strided_slice %6 {offsets = [0, 0], sizes = [8, 1], strides = [1, 1]} : vector<8x4xf32> to vector<8x1xf32>
    %31 = vector.extract_strided_slice %3 {offsets = [0, 0], sizes = [1, 256], strides = [1, 1]} : vector<4x256xf32> to vector<1x256xf32>
    %32 = vector.broadcast %30 : vector<8x1xf32> to vector<8x256xf32>
    %33 = vector.broadcast %31 : vector<1x256xf32> to vector<8x256xf32>
    %34 = arith.mulf %32, %33 : vector<8x256xf32>
    %35 = vector.extract_strided_slice %6 {offsets = [0, 1], sizes = [8, 1], strides = [1, 1]} : vector<8x4xf32> to vector<8x1xf32>
    %36 = vector.extract_strided_slice %3 {offsets = [1, 0], sizes = [1, 256], strides = [1, 1]} : vector<4x256xf32> to vector<1x256xf32>
    %37 = vector.broadcast %35 : vector<8x1xf32> to vector<8x256xf32>
    %38 = vector.broadcast %36 : vector<1x256xf32> to vector<8x256xf32>
    %39 = arith.mulf %37, %38 : vector<8x256xf32>
    %40 = vector.extract_strided_slice %6 {offsets = [0, 2], sizes = [8, 1], strides = [1, 1]} : vector<8x4xf32> to vector<8x1xf32>
    %41 = vector.extract_strided_slice %3 {offsets = [2, 0], sizes = [1, 256], strides = [1, 1]} : vector<4x256xf32> to vector<1x256xf32>
    %42 = vector.broadcast %40 : vector<8x1xf32> to vector<8x256xf32>
    %43 = vector.broadcast %41 : vector<1x256xf32> to vector<8x256xf32>
    %44 = arith.mulf %42, %43 : vector<8x256xf32>
    %45 = vector.extract_strided_slice %6 {offsets = [0, 3], sizes = [8, 1], strides = [1, 1]} : vector<8x4xf32> to vector<8x1xf32>
    %46 = vector.extract_strided_slice %3 {offsets = [3, 0], sizes = [1, 256], strides = [1, 1]} : vector<4x256xf32> to vector<1x256xf32>
    %47 = vector.broadcast %45 : vector<8x1xf32> to vector<8x256xf32>
    %48 = vector.broadcast %46 : vector<1x256xf32> to vector<8x256xf32>
    %49 = arith.mulf %47, %48 : vector<8x256xf32>
    %50 = vector.broadcast %7 : vector<8x1xf32> to vector<8x256xf32>
    %51 = arith.addf %14, %50 : vector<8x256xf32>
    %52 = arith.addf %51, %19 : vector<8x256xf32>
    %53 = arith.addf %24, %29 : vector<8x256xf32>
    %54 = arith.addf %34, %39 : vector<8x256xf32>
    %55 = arith.addf %44, %49 : vector<8x256xf32>
    %56 = arith.addf %52, %53 : vector<8x256xf32>
    %57 = arith.addf %54, %55 : vector<8x256xf32>
    %58 = arith.addf %56, %57 : vector<8x256xf32>
    %cst = arith.constant 0.000000e+00 : f32
    %59 = vector.broadcast %cst : f32 to vector<8x256xf32>
    %60 = arith.maximumf %58, %59 : vector<8x256xf32>
    %61 = vector.broadcast %8 : vector<8x1xf32> to vector<8x256xf32>
    %62 = arith.mulf %60, %61 : vector<8x256xf32>
    %cst_7 = arith.constant dense<0.000000e+00> : vector<256xf32>
    %63 = vector.multi_reduction <add>, %62, %cst_7 [0] : vector<8x256xf32> to vector<256xf32>
    %64 = vector.shape_cast %63 : vector<256xf32> to vector<1x256xf32>
    %65 = vector.broadcast %9 : vector<1x1xf32> to vector<1x256xf32>
    %66 = arith.addf %64, %65 : vector<1x256xf32>
    %cst_8 = arith.constant 0.166666672 : f32
    %67 = vector.broadcast %cst_8 : f32 to vector<1x256xf32>
    %68 = arith.mulf %66, %67 : vector<1x256xf32>
    %cst_9 = arith.constant 5.000000e-01 : f32
    %69 = vector.broadcast %cst_9 : f32 to vector<1x256xf32>
    %70 = arith.addf %68, %69 : vector<1x256xf32>
    %cst_10 = arith.constant 0.000000e+00 : f32
    %cst_11 = arith.constant 1.000000e+00 : f32
    %71 = vector.broadcast %cst_10 : f32 to vector<1x256xf32>
    %72 = arith.maximumf %71, %70 : vector<1x256xf32>
    %73 = vector.broadcast %cst_11 : f32 to vector<1x256xf32>
    %74 = arith.minimumf %73, %72 : vector<1x256xf32>
    %75 = vector.broadcast %74 : vector<1x256xf32> to vector<4x256xf32>
    %76 = arith.mulf %3, %75 : vector<4x256xf32>
    %c0_12 = arith.constant 0 : index
    %c0_13 = arith.constant 0 : index
    %c0_14 = arith.constant 0 : index
    %77 = vector.load %arg5[%c0_12, %c0_13, %c0_14] : memref<1x4x256xf32, #tpu.memory_space<vmem>>, vector<1x4x256xf32>
    %78 = vector.shape_cast %77 : vector<1x4x256xf32> to vector<4x256xf32>
    %79 = vector.shape_cast %76 : vector<4x256xf32> to vector<1x4x256xf32>
    tpu.vector_store %arg5[%c0_12, %c0_13, %c0_14], %79 {strides = array<i32>} : memref<1x4x256xf32, #tpu.memory_space<vmem>>, vector<1x4x256xf32>,
    return
  }
  func.func @transform_0(%arg0: i32, %arg1: i32) -> (i32, i32, i32) {
    %c0_i32 = arith.constant 0 : i32
    %c0_i32_0 = arith.constant 0 : i32
    return %arg0, %c0_i32, %arg1 : i32, i32, i32
  }
  func.func @transform_1(%arg0: i32, %arg1: i32) -> (i32, i32, i32) {
    %c0_i32 = arith.constant 0 : i32
    %c0_i32_0 = arith.constant 0 : i32
    return %arg0, %c0_i32, %arg1 : i32, i32, i32
  }
  func.func @transform_2(%arg0: i32, %arg1: i32) -> (i32, i32) {
    %c0_i32 = arith.constant 0 : i32
    %c0_i32_0 = arith.constant 0 : i32
    %c0_i32_1 = arith.constant 0 : i32
    return %c0_i32, %c0_i32_0 : i32, i32
  }
  func.func @transform_3(%arg0: i32, %arg1: i32) -> (i32, i32, i32) {
    %c0_i32 = arith.constant 0 : i32
    %c0_i32_0 = arith.constant 0 : i32
    return %arg0, %c0_i32, %arg1 : i32, i32, i32
  }
}

</mosaic_0001>

<llo_original>
// kernel: tpu_custom_call.1
$region0: #{tpu_custom_call.1}
  #allocation0 [shape = 'u32[]', space=smem, size = 0x4, offset = 0x4, fixed_abs, tag = 'smem constant byte address 0x4 - core index']
  #allocation1 [shape = 'u32[144,128]{1,0:T(1,128)}', space=vmem, size = 0x12000, scoped, tag = 'internal scratch']
  %s0 = inlined_call_operand.hbm [shape: f32[2,4,256], index: 0, kind: input, shape index: {}]
  %s1 = inlined_call_operand.hbm [shape: f32[2,4,256], index: 1, kind: input, shape index: {}]
  %s2 = inlined_call_operand.hbm [shape: f32[8,11], index: 2, kind: input, shape index: {}]
  %s3 = inlined_call_operand.hbm [shape: f32[2,4,256], index: 3, kind: output, shape index: {}]
  %s4 = sld [smem:[#allocation0]]
  $region57: #{tpu_custom_call.1} parent=0
    _
  %s6 = ssub.s32 1, %s4
  %s7 = scalar_select 0, %s6, %s4
  $region1: #{tpu_custom_call.1} parent=0
    #allocation2 [shape = 'u8[8192]{0}', space=vmem, size = 0x2000, scoped, tag = 'input window, operand 0']
    #allocation3 [shape = 's32[2]{0}', space=sflag, size = 0x8, scoped, tag = 'scoped memory for tpu_custom_call.1']
    #allocation4 [shape = 's32[2]{0}', space=sflag, size = 0x8, scoped, tag = 'scoped memory for tpu_custom_call.1']
    #allocation5 [shape = 'u8[8192]{0}', space=vmem, size = 0x2000, scoped, tag = 'input window, operand 1']
    #allocation6 [shape = 's32[2]{0}', space=sflag, size = 0x8, scoped, tag = 'scoped memory for tpu_custom_call.1']
    #allocation7 [shape = 'u8[4096]{0}', space=vmem, size = 0x1000, scoped, tag = 'input window, operand 2, single buffered']
    #allocation8 [shape = 'u8[8192]{0}', space=vmem, size = 0x2000, scoped, tag = 'output window, operand 0']
    %8 = vsyncpa [#allocation3], 0
    %s9 = scalar_lea.sflag [#allocation3], 1
    %10 = vsyncpa %s9, 0
    %11 = vsyncpa [#allocation6], 0
    %s12 = scalar_lea.sflag [#allocation6], 1
    %13 = vsyncpa %s12, 0
    %14 = vsyncpa [#allocation4], 0
    %s15 = scalar_lea.sflag [#allocation4], 1
    %16 = vsyncpa %s15, 0
    loop: start=0, step=1, limit=4
    $region2: #{tpu_custom_call.1} parent=1 // loop_pre_header
      _
    $region3: #{tpu_custom_call.1} parent=1 // loop_header
      %s18 = sphi 0, %s22
      %p19 = scmp.ge.s32.totalorder %s18, 4
      %s25 = sphi 0, %s37
      %s26 = sphi 0, %s33
      %s27 = sphi 0, %s25
      %s28 = sphi 0, %s26
      %s29 = sphi 0, %s27
      %s30 = sphi 0, %s28
      %s42 = sphi 0, %s44
      %s45 = sphi 0, %s42
      %s46 = sphi 0, %s45
      %s62 = sphi 0, %s46
      %s70 = sphi 0, %s72
      %s73 = sphi 0, %s70
      %s74 = sphi 0, %s73
      %s90 = sphi 0, %s74
      %s94 = sphi 0, %s94
      %s96 = sphi 0, %s94
      %s97 = sphi 0, %s96
      %s111 = sphi 0, %s97
      %s119 = sphi 0, %s121
      %s122 = sphi 0, %s119
      %s123 = sphi 0, %s122
      %s139 = sphi 0, %s123
    $region4: #{tpu_custom_call.1} parent=1 // loop_header_branch
      %21 = sbr.rel (%p19) target = $region8
    $region5: #{tpu_custom_call.1} parent=1 // loop_body
      %s23 = ssub.s32 %s18, 1
      %s24 = ssub.s32 %s18, 2
      %s31 = sadd.s32 1, %s26
      %p32 = scmp.ge.s32.totalorder %s31, 1
      %s33 = scalar_select %p32, 0, %s31
      %s34 = sadd.s32 1, %s25
      %s35 = scalar_select %p32, %s34, %s25
      %p36 = scmp.ge.s32.totalorder %s35, 2
      %s37 = scalar_select %p36, 0, %s35
      %s38 = ssub.s32 %s25, %s37
      %s39 = ssub.s32 %s26, %s33
      %s40 = sor.u32 %s38, %s39
      %p41 = scmp.eq.s32.totalorder %s40, 0
      %s43 = sadd.s32 %s42, 1
      %s44 = scalar_select %p41, %s42, %s43
      %p47 = pneg %p41
      %p48 = scmp.eq.s32.totalorder %s18, 1
      %p49 = por %p47, %p48
      %p50 = scmp.ne.s32.totalorder %s42, %s45
      %p51 = scmp.eq.s32.totalorder %s18, 0
      %p52 = por %p50, %p51
      %p53 = scmp.ne.s32.totalorder %s42, %s45
      %p54 = scmp.eq.s32.totalorder %s23, 1
      %p55 = por %p53, %p54
      %p56 = scmp.ne.s32.totalorder %s45, %s46
      %p57 = scmp.eq.s32.totalorder %s23, 0
      %p58 = por %p56, %p57
      %p59 = scmp.ne.s32.totalorder %s45, %s46
      %p60 = scmp.eq.s32.totalorder %s24, 1
      %p61 = por %p59, %p60
      %p63 = scmp.ne.s32.totalorder %s46, %s62
      %p64 = scmp.eq.s32.totalorder %s24, 0
      %p65 = por %p63, %p64
      %s66 = ssub.s32 %s25, %s37
      %s67 = ssub.s32 %s26, %s33
      %s68 = sor.u32 %s66, %s67
      %p69 = scmp.eq.s32.totalorder %s68, 0
      %s71 = sadd.s32 %s70, 1
      %s72 = scalar_select %p69, %s70, %s71
      %p75 = pneg %p69
      %p76 = scmp.eq.s32.totalorder %s18, 1
      %p77 = por %p75, %p76
      %p78 = scmp.ne.s32.totalorder %s70, %s73
      %p79 = scmp.eq.s32.totalorder %s18, 0
      %p80 = por %p78, %p79
      %p81 = scmp.ne.s32.totalorder %s70, %s73
      %p82 = scmp.eq.s32.totalorder %s23, 1
      %p83 = por %p81, %p82
      %p84 = scmp.ne.s32.totalorder %s73, %s74
      %p85 = scmp.eq.s32.totalorder %s23, 0
      %p86 = por %p84, %p85
      %p87 = scmp.ne.s32.totalorder %s73, %s74
      %p88 = scmp.eq.s32.totalorder %s24, 1
      %p89 = por %p87, %p88
      %p91 = scmp.ne.s32.totalorder %s74, %s90
      %p92 = scmp.eq.s32.totalorder %s24, 0
      %p93 = por %p91, %p92
      %s95 = sadd.s32 %s94, 1
      %p98 = scmp.eq.s32.totalorder %s18, 1
      %p99 = scmp.ne.s32.totalorder %s94, %s96
      %p100 = scmp.eq.s32.totalorder %s18, 0
      %p101 = por %p99, %p100
      %p102 = scmp.ne.s32.totalorder %s94, %s96
      %p103 = scmp.eq.s32.totalorder %s23, 1
      %p104 = por %p102, %p103
      %p105 = scmp.ne.s32.totalorder %s96, %s97
      %p106 = scmp.eq.s32.totalorder %s23, 0
      %p107 = por %p105, %p106
      %p108 = scmp.ne.s32.totalorder %s96, %s97
      %p109 = scmp.eq.s32.totalorder %s24, 1
      %p110 = por %p108, %p109
      %p112 = scmp.ne.s32.totalorder %s97, %s111
      %p113 = scmp.eq.s32.totalorder %s24, 0
      %p114 = por %p112, %p113
      %s115 = ssub.s32 %s25, %s37
      %s116 = ssub.s32 %s26, %s33
      %s117 = sor.u32 %s115, %s116
      %p118 = scmp.eq.s32.totalorder %s117, 0
      %s120 = sadd.s32 %s119, 1
      %s121 = scalar_select %p118, %s119, %s120
      %p124 = pneg %p118
      %p125 = scmp.eq.s32.totalorder %s18, 1
      %p126 = por %p124, %p125
      %p127 = scmp.ne.s32.totalorder %s119, %s122
      %p128 = scmp.eq.s32.totalorder %s18, 0
      %p129 = por %p127, %p128
      %p130 = scmp.ne.s32.totalorder %s119, %s122
      %p131 = scmp.eq.s32.totalorder %s23, 1
      %p132 = por %p130, %p131
      %p133 = scmp.ne.s32.totalorder %s122, %s123
      %p134 = scmp.eq.s32.totalorder %s23, 0
      %p135 = por %p133, %p134
      %p136 = scmp.ne.s32.totalorder %s122, %s123
      %p137 = scmp.eq.s32.totalorder %s24, 1
      %p138 = por %p136, %p137
      %p140 = scmp.ne.s32.totalorder %s123, %s139
      %p141 = scmp.eq.s32.totalorder %s24, 0
      %p142 = por %p140, %p141
      %p143 = scmp.le.s32.totalorder 1, %s18
      %p144 = scmp.lt.s32.totalorder %s18, 3
      %p145 = pnand %p143, %p144
      %p146 = pneg %p145
      // Predicated region
      $region9: #{tpu_custom_call.1} parent=5 // pred_check
        _
      $region10: #{tpu_custom_call.1} parent=5 // pred_check_branch
        %148 = sbr.rel (%p145) target = $region12
      $region11: #{tpu_custom_call.1} parent=5 // pred_region
        %s149 = ssub.s32 %s18, 1
        // Predicated region
        $region13: #{tpu_custom_call.1} parent=11 // pred_check
          %p150 = pneg %p107
        $region14: #{tpu_custom_call.1} parent=11 // pred_check_branch
          %152 = sbr.rel (%p150) target = $region16
        $region15: #{tpu_custom_call.1} parent=11 // pred_region
          %s154 = ssub.s32 128, 128
          %155 = vsyncadd [#allocation6], %s154
          %s157 = sshll.u32 [#allocation7], 4
          %s158 = int_to_ptr.vmem [resolvable:$true] %s157
          %160 = dma.hbm_to_vmem [thread:$0]  %s2, 128, %s158, [#allocation6]
        $region16: #{tpu_custom_call.1} parent=11 // pred_fallthru
          _
      $region12: #{tpu_custom_call.1} parent=5 // pred_fallthru
        _
      %p161 = scmp.lt.s32.totalorder %s18, 2
      // Predicated region
      $region17: #{tpu_custom_call.1} parent=5 // pred_check
        %p162 = pneg %p161
      $region18: #{tpu_custom_call.1} parent=5 // pred_check_branch
        %164 = sbr.rel (%p162) target = $region20
      $region19: #{tpu_custom_call.1} parent=5 // pred_region
        // Predicated region
        $region21: #{tpu_custom_call.1} parent=19 // pred_check
          %p165 = pneg %p52
        $region22: #{tpu_custom_call.1} parent=19 // pred_check_branch
          %167 = sbr.rel (%p165) target = $region24
        $region23: #{tpu_custom_call.1} parent=19 // pred_region
          %s168 = sand.u32 %s42, 1
          %s169 = scalar_lea.sflag [#allocation3], %s168
          %s170 = sand.u32 %s42, 1
          %s171 = smul.addr %s170, 8
          %s172 = scalar_lea.vmem [#allocation2], %s171
          %s173 = smul.u32 2, %s26
          %s175 = ssub.s32 128, 128
          %176 = vsyncadd %s169, %s175
          %s177 = smul.addr %s25, 2
          %s178 = sadd.s32 %s173, %s177
          %s179 = smul.addr %s178, 64
          %s180 = scalar_lea.hbm %s0, %s179
          %s182 = sshll.u32 %s172, 4
          %s183 = int_to_ptr.vmem [resolvable:$true] %s182
          %185 = dma.hbm_to_vmem [thread:$0]  %s180, 128, %s183, %s169
        $region24: #{tpu_custom_call.1} parent=19 // pred_fallthru
          _
        // Predicated region
        $region25: #{tpu_custom_call.1} parent=19 // pred_check
          %p186 = pneg %p80
        $region26: #{tpu_custom_call.1} parent=19 // pred_check_branch
          %188 = sbr.rel (%p186) target = $region28
        $region27: #{tpu_custom_call.1} parent=19 // pred_region
          %s189 = sand.u32 %s18, 1
          %s190 = scalar_lea.sflag [#allocation6], %s189
          %s191 = sand.u32 %s70, 1
          %s192 = smul.addr %s191, 8
          %s193 = scalar_lea.vmem [#allocation5], %s192
          %s194 = smul.u32 2, %s26
          %s196 = ssub.s32 128, 128
          %197 = vsyncadd %s190, %s196
          %s198 = smul.addr %s25, 2
          %s199 = sadd.s32 %s194, %s198
          %s200 = smul.addr %s199, 64
          %s201 = scalar_lea.hbm %s1, %s200
          %s203 = sshll.u32 %s193, 4
          %s204 = int_to_ptr.vmem [resolvable:$true] %s203
          %206 = dma.hbm_to_vmem [thread:$0]  %s201, 128, %s204, %s190
        $region28: #{tpu_custom_call.1} parent=19 // pred_fallthru
          _
      $region20: #{tpu_custom_call.1} parent=5 // pred_fallthru
        _
      %p207 = scmp.le.s32.totalorder 1, %s18
      %p208 = scmp.lt.s32.totalorder %s18, 3
      %p209 = pnand %p207, %p208
      %p210 = pneg %p209
      // Predicated region
      $region29: #{tpu_custom_call.1} parent=5 // pred_check
        _
      $region30: #{tpu_custom_call.1} parent=5 // pred_check_branch
        %212 = sbr.rel (%p209) target = $region32
      $region31: #{tpu_custom_call.1} parent=5 // pred_region
        %s213 = ssub.s32 %s18, 1
        %s214 = sand.u32 %s45, 1
        %s215 = scalar_lea.sflag [#allocation3], %s214
        %s216 = sand.u32 %s45, 1
        %s217 = smul.addr %s216, 8
        %s218 = scalar_lea.vmem [#allocation2], %s217
        // Predicated region
        $region33: #{tpu_custom_call.1} parent=31 // pred_check
          %p219 = pneg %p58
        $region34: #{tpu_custom_call.1} parent=31 // pred_check_branch
          %221 = sbr.rel (%p219) target = $region36
        $region35: #{tpu_custom_call.1} parent=31 // pred_region
          %222 = dma.done %s215, 128
        $region36: #{tpu_custom_call.1} parent=31 // pred_fallthru
          _
        %s223 = sand.u32 %s23, 1
        %s224 = scalar_lea.sflag [#allocation6], %s223
        %s225 = sand.u32 %s73, 1
        %s226 = smul.addr %s225, 8
        %s227 = scalar_lea.vmem [#allocation5], %s226
        // Predicated region
        $region37: #{tpu_custom_call.1} parent=31 // pred_check
          %p228 = pneg %p86
        $region38: #{tpu_custom_call.1} parent=31 // pred_check_branch
          %230 = sbr.rel (%p228) target = $region40
        $region39: #{tpu_custom_call.1} parent=31 // pred_region
          %231 = dma.done %s224, 128
        $region40: #{tpu_custom_call.1} parent=31 // pred_fallthru
          _
        // Predicated region
        $region41: #{tpu_custom_call.1} parent=31 // pred_check
          %p232 = pneg %p107
        $region42: #{tpu_custom_call.1} parent=31 // pred_check_branch
          %234 = sbr.rel (%p232) target = $region44
        $region43: #{tpu_custom_call.1} parent=31 // pred_region
          %235 = dma.done [#allocation6], 128
        $region44: #{tpu_custom_call.1} parent=31 // pred_fallthru
          _
        %s236 = sand.u32 %s45, 1
        %s237 = scalar_lea.sflag [#allocation3], %s236
        %s238 = sand.u32 %s45, 1
        %s239 = smul.addr %s238, 8
        %s240 = scalar_lea.vmem [#allocation2], %s239
        %p241 = pneg %p58
        %p242 = pneg %p55
        %s243 = sand.u32 %s23, 1
        %s244 = scalar_lea.sflag [#allocation6], %s243
        %s245 = sand.u32 %s73, 1
        %s246 = smul.addr %s245, 8
        %s247 = scalar_lea.vmem [#allocation5], %s246
        %p248 = pneg %p86
        %p249 = pneg %p83
        %p250 = pneg %p107
        %p251 = pneg %p104
        %p252 = pneg %p135
        %p253 = pneg %p132
        %s254 = sand.u32 %s122, 1
        %s255 = scalar_lea.sflag [#allocation4], %s254
        %s256 = sand.u32 %s122, 1
        %s257 = smul.addr %s256, 8
        %s258 = scalar_lea.vmem [#allocation8], %s257
        %s259 = smul.u32 2, %s28
        %s260 = smul.u32 2, %s28
        %s261 = smul.u32 2, %s28
        %v262 = vld [vmem:[%s218] sm:$0xff]
        %v263 = vld [vmem:[%s227] sm:$0xff]
        %v264 = vld [vmem:[#allocation7] sm:$0xff]
        %266 = vset.pattern.permute.xlu0 0
        %267 = vperm.xlu0 %266, %v264
        %v268 = vpop.permute.xlu0 %267
        %v271 = vlaneseq
        %v272 = vshrl.u32 %v271, 7
        %v273 = vsub.s32 0, %v272
        %v274 = vrot.slane %v262, %v273
        %v275 = vlaneseq
        %v276 = vshrl.u32 %v275, 7
        %v277 = vsub.s32 4, %v276
        %v278 = vrot.slane %v262, %v277
        %v281 = vlaneseq
        %v282 = vshrl.u32 %v281, 7
        %v283 = vsub.s32 0, %v282
        %v284 = vrot.slane %v274, %v283
        %v285 = vlaneseq
        %v286 = vshrl.u32 %v285, 7
        %v287 = vsub.s32 0, %v286
        %v288 = vrot.slane %v278, %v287
        %v289 = vmul.f32 %v268, %v284
        %v290 = vmul.f32 %v268, %v288
        %291 = vset.pattern.permute.xlu0 1
        %292 = vperm.xlu0 %291, %v264
        %v293 = vpop.permute.xlu0 %292
        %v295 = vlaneseq
        %v296 = vshrl.u32 %v295, 7
        %v297 = vsub.s32 1, %v296
        %v298 = vrot.slane %v262, %v297
        %v299 = vlaneseq
        %v300 = vshrl.u32 %v299, 7
        %v301 = vsub.s32 5, %v300
        %v302 = vrot.slane %v262, %v301
        %v305 = vlaneseq
        %v306 = vshrl.u32 %v305, 7
        %v307 = vsub.s32 1, %v306
        %v308 = vrot.slane %v298, %v307
        %v309 = vlaneseq
        %v310 = vshrl.u32 %v309, 7
        %v311 = vsub.s32 1, %v310
        %v312 = vrot.slane %v302, %v311
        %v313 = vmul.f32 %v293, %v308
        %v314 = vmul.f32 %v293, %v312
        %315 = vset.pattern.permute.xlu0 2
        %316 = vperm.xlu0 %315, %v264
        %v317 = vpop.permute.xlu0 %316
        %v319 = vlaneseq
        %v320 = vshrl.u32 %v319, 7
        %v321 = vsub.s32 2, %v320
        %v322 = vrot.slane %v262, %v321
        %v323 = vlaneseq
        %v324 = vshrl.u32 %v323, 7
        %v325 = vsub.s32 6, %v324
        %v326 = vrot.slane %v262, %v325
        %v329 = vlaneseq
        %v330 = vshrl.u32 %v329, 7
        %v331 = vsub.s32 2, %v330
        %v332 = vrot.slane %v322, %v331
        %v333 = vlaneseq
        %v334 = vshrl.u32 %v333, 7
        %v335 = vsub.s32 2, %v334
        %v336 = vrot.slane %v326, %v335
        %v337 = vmul.f32 %v317, %v332
        %v338 = vmul.f32 %v317, %v336
        %339 = vset.pattern.permute.xlu0 3
        %340 = vperm.xlu0 %339, %v264
        %v341 = vpop.permute.xlu0 %340
        %v343 = vlaneseq
        %v344 = vshrl.u32 %v343, 7
        %v345 = vsub.s32 3, %v344
        %v346 = vrot.slane %v262, %v345
        %v347 = vlaneseq
        %v348 = vshrl.u32 %v347, 7
        %v349 = vsub.s32 7, %v348
        %v350 = vrot.slane %v262, %v349
        %v353 = vlaneseq
        %v354 = vshrl.u32 %v353, 7
        %v355 = vsub.s32 3, %v354
        %v356 = vrot.slane %v346, %v355
        %v357 = vlaneseq
        %v358 = vshrl.u32 %v357, 7
        %v359 = vsub.s32 3, %v358
        %v360 = vrot.slane %v350, %v359
        %v361 = vmul.f32 %v341, %v356
        %v362 = vmul.f32 %v341, %v360
        %363 = vset.pattern.permute.xlu0 4
        %364 = vperm.xlu0 %363, %v264
        %v365 = vpop.permute.xlu0 %364
        %v368 = vlaneseq
        %v369 = vshrl.u32 %v368, 7
        %v370 = vsub.s32 0, %v369
        %v371 = vrot.slane %v263, %v370
        %v372 = vlaneseq
        %v373 = vshrl.u32 %v372, 7
        %v374 = vsub.s32 4, %v373
        %v375 = vrot.slane %v263, %v374
        %v378 = vlaneseq
        %v379 = vshrl.u32 %v378, 7
        %v380 = vsub.s32 0, %v379
        %v381 = vrot.slane %v371, %v380
        %v382 = vlaneseq
        %v383 = vshrl.u32 %v382, 7
        %v384 = vsub.s32 0, %v383
        %v385 = vrot.slane %v375, %v384
        %v386 = vmul.f32 %v365, %v381
        %v387 = vmul.f32 %v365, %v385
        %388 = vset.pattern.permute.xlu0 5
        %389 = vperm.xlu0 %388, %v264
        %v390 = vpop.permute.xlu0 %389
        %v392 = vlaneseq
        %v393 = vshrl.u32 %v392, 7
        %v394 = vsub.s32 1, %v393
        %v395 = vrot.slane %v263, %v394
        %v396 = vlaneseq
        %v397 = vshrl.u32 %v396, 7
        %v398 = vsub.s32 5, %v397
        %v399 = vrot.slane %v263, %v398
        %v402 = vlaneseq
        %v403 = vshrl.u32 %v402, 7
        %v404 = vsub.s32 1, %v403
        %v405 = vrot.slane %v395, %v404
        %v406 = vlaneseq
        %v407 = vshrl.u32 %v406, 7
        %v408 = vsub.s32 1, %v407
        %v409 = vrot.slane %v399, %v408
        %v410 = vmul.f32 %v390, %v405
        %v411 = vmul.f32 %v390, %v409
        %412 = vset.pattern.permute.xlu0 6
        %413 = vperm.xlu0 %412, %v264
        %v414 = vpop.permute.xlu0 %413
        %v416 = vlaneseq
        %v417 = vshrl.u32 %v416, 7
        %v418 = vsub.s32 2, %v417
        %v419 = vrot.slane %v263, %v418
        %v420 = vlaneseq
        %v421 = vshrl.u32 %v420, 7
        %v422 = vsub.s32 6, %v421
        %v423 = vrot.slane %v263, %v422
        %v426 = vlaneseq
        %v427 = vshrl.u32 %v426, 7
        %v428 = vsub.s32 2, %v427
        %v429 = vrot.slane %v419, %v428
        %v430 = vlaneseq
        %v431 = vshrl.u32 %v430, 7
        %v432 = vsub.s32 2, %v431
        %v433 = vrot.slane %v423, %v432
        %v434 = vmul.f32 %v414, %v429
        %v435 = vmul.f32 %v414, %v433
        %436 = vset.pattern.permute.xlu0 7
        %437 = vperm.xlu0 %436, %v264
        %v438 = vpop.permute.xlu0 %437
        %v440 = vlaneseq
        %v441 = vshrl.u32 %v440, 7
        %v442 = vsub.s32 3, %v441
        %v443 = vrot.slane %v263, %v442
        %v444 = vlaneseq
        %v445 = vshrl.u32 %v444, 7
        %v446 = vsub.s32 7, %v445
        %v447 = vrot.slane %v263, %v446
        %v450 = vlaneseq
        %v451 = vshrl.u32 %v450, 7
        %v452 = vsub.s32 3, %v451
        %v453 = vrot.slane %v443, %v452
        %v454 = vlaneseq
        %v455 = vshrl.u32 %v454, 7
        %v456 = vsub.s32 3, %v455
        %v457 = vrot.slane %v447, %v456
        %v458 = vmul.f32 %v438, %v453
        %v459 = vmul.f32 %v438, %v457
        %460 = vset.pattern.permute.xlu0 8
        %461 = vperm.xlu0 %460, %v264
        %v462 = vpop.permute.xlu0 %461
        %v464 = vadd.f32 %v289, %v462
        %v465 = vadd.f32 %v290, %v462
        %v466 = vadd.f32 %v464, %v313
        %v467 = vadd.f32 %v465, %v314
        %v468 = vadd.f32 %v337, %v361
        %v469 = vadd.f32 %v338, %v362
        %v470 = vadd.f32 %v386, %v410
        %v471 = vadd.f32 %v387, %v411
        %v472 = vadd.f32 %v434, %v458
        %v473 = vadd.f32 %v435, %v459
        %v474 = vadd.f32 %v466, %v468
        %v475 = vadd.f32 %v467, %v469
        %v476 = vadd.f32 %v470, %v472
        %v477 = vadd.f32 %v471, %v473
        %v478 = vadd.f32 %v474, %v476
        %v479 = vadd.f32 %v475, %v477
        %v480 = vmax.f32 %v478, 0.0
        %v481 = vmax.f32 %v479, 0.0
        %482 = vset.pattern.permute.xlu0 9
        %483 = vperm.xlu0 %482, %v264
        %v484 = vpop.permute.xlu0 %483
        %v486 = vmul.f32 %v480, %v484
        %v487 = vmul.f32 %v481, %v484
        %v488 = vrot.slane %v486, 4
        %v489 = vadd.f32 %v486, %v488
        %v490 = vrot.slane %v489, 2
        %v491 = vadd.f32 %v489, %v490
        %v492 = vrot.slane %v491, 1
        %v493 = vadd.f32 %v491, %v492
        %v494 = vrot.slane %v487, 4
        %v495 = vadd.f32 %v487, %v494
        %v496 = vrot.slane %v495, 2
        %v497 = vadd.f32 %v495, %v496
        %v498 = vrot.slane %v497, 1
        %v499 = vadd.f32 %v497, %v498
        %500 = vset.pattern.permute.xlu0 10
        %501 = vperm.xlu0 %500, %v264
        %v502 = vpop.permute.xlu0 %501
        %v504 = vadd.f32 %v493, %v502
        %v505 = vadd.f32 %v499, %v502
        %v506 = vmul.f32 %v504, 0.16666667
        %v507 = vmul.f32 %v505, 0.16666667
        %v508 = vadd.f32 %v506, 0.5
        %v509 = vadd.f32 %v507, 0.5
        %v510 = vmax.f32 %v508, 0.0
        %v511 = vmax.f32 %v509, 0.0
        %v512 = vmin.f32 %v510, 1.0
        %v513 = vmin.f32 %v511, 1.0
        %v514 = vlaneseq
        %v515 = vshrl.u32 %v514, 7
        %v516 = vsub.s32 0, %v515
        %v517 = vrot.slane %v512, %v516
        %v518 = vlaneseq
        %v519 = vshrl.u32 %v518, 7
        %v520 = vsub.s32 0, %v519
        %v521 = vrot.slane %v513, %v520
        %v524 = vcombine.low %v517, %v521
        %v526 = vmul.f32 %v263, %v524
        %527 = vst [vmem:[%s258] sm:$0xff] %v526
        %s528 = sand.u32 %s122, 1
        %s529 = scalar_lea.sflag [#allocation4], %s528
        %s530 = sand.u32 %s122, 1
        %s531 = smul.addr %s530, 8
        %s532 = scalar_lea.vmem [#allocation8], %s531
        // Predicated region
        $region45: #{tpu_custom_call.1} parent=31 // pred_check
          %p533 = pneg %p132
        $region46: #{tpu_custom_call.1} parent=31 // pred_check_branch
          %535 = sbr.rel (%p533) target = $region48
        $region47: #{tpu_custom_call.1} parent=31 // pred_region
          %s536 = smul.u32 2, %s28
          %s538 = ssub.s32 128, 128
          %539 = vsyncadd %s529, %s538
          %s540 = smul.addr %s27, 2
          %s541 = sadd.s32 %s536, %s540
          %s542 = smul.addr %s541, 64
          %s543 = scalar_lea.hbm %s3, %s542
          %s545 = sshll.u32 %s532, 4
          %s546 = int_to_ptr.vmem [resolvable:$true] %s545
          %548 = dma.vmem_to_hbm [thread:$0]  %s546, 128, %s543, %s529
        $region48: #{tpu_custom_call.1} parent=31 // pred_fallthru
          _
      $region32: #{tpu_custom_call.1} parent=5 // pred_fallthru
        _
      %p549 = scmp.le.s32.totalorder 2, %s18
      // Predicated region
      $region49: #{tpu_custom_call.1} parent=5 // pred_check
        %p550 = pneg %p549
      $region50: #{tpu_custom_call.1} parent=5 // pred_check_branch
        %552 = sbr.rel (%p550) target = $region52
      $region51: #{tpu_custom_call.1} parent=5 // pred_region
        %s553 = ssub.s32 %s18, 2
        // Predicated region
        $region53: #{tpu_custom_call.1} parent=51 // pred_check
          %p554 = pneg %p138
        $region54: #{tpu_custom_call.1} parent=51 // pred_check_branch
          %556 = sbr.rel (%p554) target = $region56
        $region55: #{tpu_custom_call.1} parent=51 // pred_region
          %s557 = sand.u32 %s123, 1
          %s558 = scalar_lea.sflag [#allocation4], %s557
          %s559 = sand.u32 %s123, 1
          %s560 = smul.addr %s559, 8
          %s561 = scalar_lea.vmem [#allocation8], %s560
          %562 = dma.done %s558, 128
        $region56: #{tpu_custom_call.1} parent=51 // pred_fallthru
          _
      $region52: #{tpu_custom_call.1} parent=5 // pred_fallthru
        _
    $region6: #{tpu_custom_call.1} parent=1 // loop_footer
      %s22 = sadd.s32 1, %s18
    $region7: #{tpu_custom_call.1} parent=1 // loop_footer_branch
      %17 = sbr.rel target = $region3
    $region8: #{tpu_custom_call.1} parent=1 // loop_exit
      _
    %563 = vsyncpa [#allocation3], 1
    %s564 = scalar_lea.sflag [#allocation3], 1
    %565 = vsyncpa %s564, 1
    %566 = vsyncpa [#allocation6], 1
    %s567 = scalar_lea.sflag [#allocation6], 1
    %568 = vsyncpa %s567, 1
    %569 = vsyncpa [#allocation4], 1
    %s570 = scalar_lea.sflag [#allocation4], 1
    %571 = vsyncpa %s570, 1

</llo_original>
